<compile_context>
chip_gen: v7x
topology: tpu7x:2x2x1
jax: 0.10.0
libtpu: 0.0.40
codegen_flags: <defaults>
</compile_context>

<pallas_src>
import jax
import jax.numpy as jnp
from jax.experimental import pallas as pl
from jax.experimental.pallas import tpu as pltpu


def _round_up(x, m):
    return (x + m - 1) // m * m


def _spmm_kernel_resident(mask_ref, emb_ref, out_ref):
    # Single K step: the whole gathered embedding block is VMEM-resident.
    out_ref[...] = jnp.dot(
        mask_ref[...], emb_ref[...], preferred_element_type=jnp.float32
    )


def _spmm_kernel_ktiled(mask_ref, emb_ref, out_ref):
    # Accumulate directly into the (f32, K-resident) output block.
    @pl.when(pl.program_id(1) == 0)
    def _():
        out_ref[...] = jnp.zeros_like(out_ref)

    out_ref[...] += jnp.dot(
        mask_ref[...], emb_ref[...], preferred_element_type=jnp.float32
    )


def mean_aggregator_with_weights_forward(
    indices,            # (2, nnz) int32 COO coords of the sparse mask
    v,                  # (nnz,)   float32 edge weights
    unique_nodes_list,  # (U,)     int32 ids into the embedding table
    embedding_table,    # (V, D)   float32 -- plays the role of `self.features`
    num_nodes_real,     # N (python int)
    *,
    row_tile=512,                       # rows of the mask per MXU pass
    k_tile=2048,                        # contraction tile when K-tiling is needed
    compute_dtype=jnp.bfloat16,         # operand dtype (accumulation is f32)
    max_resident_embed_bytes=6 << 20,   # keep embed fully VMEM-resident below this
):
    N = int(num_nodes_real)
    U = int(unique_nodes_list.shape[0])
    D = int(embedding_table.shape[1])
    cs = jnp.dtype(compute_dtype).itemsize

    # ---------------- tile sizing (all (8,128)/sublane-pack friendly) ----------
    D_pad = _round_up(D, 128)
    U128 = _round_up(max(U, 1), 128)

    # K axis: resident embedding if it is small, otherwise K-tile it.
    emb_bytes = U128 * D_pad * cs
    if emb_bytes <= int(max_resident_embed_bytes):
        k_tile = U128                       # one K step -> embed DMA'd once
    else:
        k_tile = _round_up(min(int(k_tile), U128), 128)
    U_pad = _round_up(U128, k_tile)
    n_k = U_pad // k_tile

    # Row axis.
    N16 = _round_up(max(N, 1), 16)
    row_tile = _round_up(min(int(row_tile), N16), 16)
    # v7x: guarantee >= 2 row tiles (both TensorCores) when the batch allows it.
    if N16 >= 256 and row_tile >= N16:
        row_tile = _round_up((N16 + 1) // 2, 16)
    # Keep each mask tile comfortably double-bufferable (<= ~8 MiB per buffer).
    max_rows_by_vmem = max(16, ((8 << 20) // (k_tile * cs)) // 16 * 16)
    row_tile = min(row_tile, max_rows_by_vmem)
    N_pad = _round_up(N16, row_tile)
    n_row = N_pad // row_tile

    # ---------------- host-side glue (kept minimal-traffic) --------------------
    # torch.sparse_coo_tensor(...).mm semantics: duplicate coordinates sum.
    # Scatter straight into a compute_dtype buffer (no f32 round-trip + cast).
    mask = (
        jnp.zeros((N_pad, U_pad), compute_dtype)
        .at[indices[0], indices[1]]
        .add(v.astype(compute_dtype))
    )

    # self.features(unique_nodes_list) -> embedding lookup (glue), fused cast.
    embed = jnp.take(embedding_table, unique_nodes_list, axis=0).astype(compute_dtype)
    if (U_pad, D_pad) != (U, D):
        embed = jnp.pad(embed, ((0, U_pad - U), (0, D_pad - D)))

    # ---------------- pallas_call ----------------------------------------------
    kernel = _spmm_kernel_resident if n_k == 1 else _spmm_kernel_ktiled

    mask_tile_b = row_tile * k_tile * cs
    emb_tile_b = k_tile * D_pad * cs
    out_tile_b = row_tile * D_pad * 4
    vmem_bytes = 2 * (mask_tile_b + emb_tile_b + out_tile_b) + (2 << 20)
    vmem_bytes = int(min(max(vmem_bytes, 8 << 20), 64 << 20))

    emb_fetches = 1 if n_k == 1 else n_row
    cost = pl.CostEstimate(
        flops=2 * N_pad * U_pad * D_pad,
        transcendentals=0,
        bytes_accessed=int(
            N_pad * U_pad * cs                    # mask, read once
            + U_pad * D_pad * cs * emb_fetches    # embed
            + N_pad * D_pad * 4                   # output (f32)
        ),
    )

    out = pl.pallas_call(
        kernel,
        out_shape=jax.ShapeDtypeStruct((N_pad, D_pad), jnp.float32),
        grid_spec=pltpu.PrefetchScalarGridSpec(
            num_scalar_prefetch=0,
            grid=(n_row, n_k),
            in_specs=[
                pl.BlockSpec((row_tile, k_tile), lambda i, k: (i, k)),  # mask tile
                pl.BlockSpec((k_tile, D_pad), lambda i, k: (k, 0)),     # embed tile
            ],
            out_specs=pl.BlockSpec((row_tile, D_pad), lambda i, k: (i, 0)),
        ),
        compiler_params=pltpu.CompilerParams(
            dimension_semantics=("parallel", "arbitrary"),
            vmem_limit_bytes=vmem_bytes,
        ),
        cost_estimate=cost,
    )(mask, embed)

    return out[:N, :D]


if __name__ == "__main__":
    key = jax.random.PRNGKey(0)
    k_emb, k_row, k_col, k_val, k_uniq = jax.random.split(key, 5)

    # Small synthetic graph-sampling instance. Shapes deliberately NOT multiples
    # of the tiles to exercise padding / multi-tile paths.
    N = 24      # len(nodes_real)        (batch of nodes)
    U = 200     # len(unique_nodes_list) (unique sampled neighbors)
    D = 96      # embedding dim (pads to 128 lanes)
    V = 300     # total nodes in the graph (embedding table rows)
    NNZ = 160   # number of (node, neighbor) edges with weights

    embedding_table = jax.random.normal(k_emb, (V, D), dtype=jnp.float32)

    rows = jax.random.randint(k_row, (NNZ,), 0, N, dtype=jnp.int32)
    cols = jax.random.randint(k_col, (NNZ,), 0, U, dtype=jnp.int32)
    indices = jnp.stack([rows, cols], axis=0)                      # (2, nnz)
    v = jax.random.uniform(k_val, (NNZ,), dtype=jnp.float32)       # edge weights
    unique_nodes_list = jax.random.randint(k_uniq, (U,), 0, V, dtype=jnp.int32)

    # Path 1: default config -> embedding fully VMEM-resident, single K step.
    out_resident = mean_aggregator_with_weights_forward(
        indices, v, unique_nodes_list, embedding_table, N,
    )
    # Path 2: force K-tiling + multiple row tiles (covers the accumulator path).
    out_ktiled = mean_aggregator_with_weights_forward(
        indices, v, unique_nodes_list, embedding_table, N,
        row_tile=16, k_tile=128, max_resident_embed_bytes=0,
    )
    out_resident = jax.block_until_ready(out_resident)
    out_ktiled = jax.block_until_ready(out_ktiled)

    # Pure-JAX references.
    mask_f32 = jnp.zeros((N, U), jnp.float32).at[indices[0], indices[1]].add(v)
    embed_f32 = jnp.take(embedding_table, unique_nodes_list, axis=0)
    ref_f32 = mask_f32 @ embed_f32                                 # torch module semantics

    # Reference with the exact same operand preparation as the kernel (bf16).
    mask_bf = (
        jnp.zeros((N, U), jnp.bfloat16)
        .at[indices[0], indices[1]]
        .add(v.astype(jnp.bfloat16))
    )
    ref_bf16 = jnp.dot(
        mask_bf.astype(jnp.float32), embed_f32.astype(jnp.bfloat16).astype(jnp.float32)
    )

    for name, out in (("resident", out_resident), ("ktiled", out_ktiled)):
        assert out.shape == (N, D), name
        assert jnp.allclose(out, ref_bf16, atol=2e-3, rtol=2e-3), \
            f"{name}: kernel disagrees with bf16-operand reference"
        assert jnp.allclose(out, ref_f32, atol=5e-2, rtol=5e-2), \
            f"{name}: kernel drifted too far from f32 module semantics"

    print("KERNEL_OK")
</pallas_src>

<mosaic_0001>
module attributes {stable_mosaic.version = 11 : i64} {
  func.func @_spmm_kernel_resident(%arg0: i32, %arg1: i32, %arg2: memref<32x256xbf16, #tpu.memory_space<vmem>>, %arg3: memref<256x128xbf16, #tpu.memory_space<vmem>>, %arg4: memref<32x128xf32, #tpu.memory_space<vmem>>) attributes {dimension_semantics = [#tpu.dimension_semantics<parallel>, #tpu.dimension_semantics<arbitrary>], iteration_bounds = array<i64: 1, 1>, scalar_prefetch = 0 : i64, scratch_operands = 0 : i64, tpu.core_type = #tpu.core_type<tc>, window_params = [{transform_indices = @transform_0, window_bounds = array<i64: 32, 256>}, {transform_indices = @transform_1, window_bounds = array<i64: 256, 128>}, {transform_indices = @transform_2, window_bounds = array<i64: 32, 128>}]} {
    %c0 = arith.constant 0 : index
    %c0_0 = arith.constant 0 : index
    %0 = vector.load %arg2[%c0, %c0_0] : memref<32x256xbf16, #tpu.memory_space<vmem>>, vector<32x256xbf16>
    %c0_1 = arith.constant 0 : index
    %c0_2 = arith.constant 0 : index
    %1 = vector.load %arg3[%c0_1, %c0_2] : memref<256x128xbf16, #tpu.memory_space<vmem>>, vector<256x128xbf16>
    %cst = arith.constant dense<0.000000e+00> : vector<32x128xf32>
    %2 = tpu.matmul %0, %1, %cst {dimension_numbers = #tpu.dot_dimension_numbers<[1], [0], [0], [1], [0, 0, 1, 1], [], []>} : vector<32x256xbf16>, vector<256x128xbf16>, vector<32x128xf32> -> vector<32x128xf32>
    %c0_3 = arith.constant 0 : index
    %c0_4 = arith.constant 0 : index
    %3 = vector.load %arg4[%c0_3, %c0_4] : memref<32x128xf32, #tpu.memory_space<vmem>>, vector<32x128xf32>
    tpu.vector_store %arg4[%c0_3, %c0_4], %2 {strides = array<i32>} : memref<32x128xf32, #tpu.memory_space<vmem>>, vector<32x128xf32>,
    return
  }
  func.func @transform_0(%arg0: i32, %arg1: i32) -> (i32, i32) {
    %c0_i32 = arith.constant 0 : i32
    return %arg0, %arg1 : i32, i32
  }
  func.func @transform_1(%arg0: i32, %arg1: i32) -> (i32, i32) {
    %c0_i32 = arith.constant 0 : i32
    %c0_i32_0 = arith.constant 0 : i32
    return %arg1, %c0_i32 : i32, i32
  }
  func.func @transform_2(%arg0: i32, %arg1: i32) -> (i32, i32) {
    %c0_i32 = arith.constant 0 : i32
    %c0_i32_0 = arith.constant 0 : i32
    return %arg0, %c0_i32 : i32, i32
  }
}

</mosaic_0001>

<llo_original>
// kernel: tpu_custom_call.1
$region0: #{tpu_custom_call.1}
  #allocation0 [shape = 'u32[]', space=smem, size = 0x4, offset = 0x4, fixed_abs, tag = 'smem constant byte address 0x4 - core index']
  #allocation1 [shape = 'u32[144,128]{1,0:T(1,128)}', space=vmem, size = 0x12000, scoped, tag = 'internal scratch']
  %s0 = inlined_call_operand.hbm [shape: bf16[32,256], index: 0, kind: input, shape index: {}]
  %s1 = inlined_call_operand.hbm [shape: bf16[256,128], index: 1, kind: input, shape index: {}]
  %s2 = inlined_call_operand.hbm [shape: f32[32,128], index: 2, kind: output, shape index: {}]
  %s3 = sld [smem:[#allocation0]]
  $region26: #{tpu_custom_call.1} parent=0
    _
  %s5 = ssub.s32 1, %s3
  %s6 = scalar_select 0, %s5, %s3
  $region1: #{tpu_custom_call.1} parent=0
    #allocation2 [shape = 'u8[16384]{0}', space=vmem, size = 0x4000, scoped, tag = 'input window, operand 0, single buffered']
    #allocation3 [shape = 's32[1]{0}', space=sflag, size = 0x4, scoped, tag = 'scoped memory for tpu_custom_call.1']
    #allocation4 [shape = 's32[1]{0}', space=sflag, size = 0x4, scoped, tag = 'scoped memory for tpu_custom_call.1']
    #allocation5 [shape = 'u8[65536]{0}', space=vmem, size = 0x10000, scoped, tag = 'input window, operand 1, single buffered']
    #allocation6 [shape = 's32[1]{0}', space=sflag, size = 0x4, scoped, tag = 'scoped memory for tpu_custom_call.1']
    #allocation7 [shape = 'u8[16384]{0}', space=vmem, size = 0x4000, scoped, tag = 'output window, operand 0, single buffered']
    %7 = vsyncpa [#allocation3], 0
    %8 = vsyncpa [#allocation6], 0
    %9 = vsyncpa [#allocation4], 0
    // Predicated region
    $region2: #{tpu_custom_call.1} parent=1 // pred_check
      _
    $region3: #{tpu_custom_call.1} parent=1 // pred_check_branch
      %11 = sbr.rel (0) target = $region5
    $region4: #{tpu_custom_call.1} parent=1 // pred_region
      %s13 = ssub.s32 512, 512
      %14 = vsyncadd [#allocation3], %s13
      %s15 = sshll.u32 [#allocation2], 4
      %s16 = int_to_ptr.vmem [resolvable:$true] %s15
      %21 = dma.hbm_to_vmem [thread:$0]  %s0, 512, %s16, [#allocation3], 128, 128, 8
    $region5: #{tpu_custom_call.1} parent=1 // pred_fallthru
      _
    // Predicated region
    $region6: #{tpu_custom_call.1} parent=1 // pred_check
      _
    $region7: #{tpu_custom_call.1} parent=1 // pred_check_branch
      %23 = sbr.rel (0) target = $region9
    $region8: #{tpu_custom_call.1} parent=1 // pred_region
      %s25 = ssub.s32 2048, 2048
      %26 = vsyncadd [#allocation6], %s25
      %s27 = sshll.u32 [#allocation5], 4
      %s28 = int_to_ptr.vmem [resolvable:$true] %s27
      %33 = dma.hbm_to_vmem [thread:$0]  %s1, 2048, %s28, [#allocation6], 64, 64, 4
    $region9: #{tpu_custom_call.1} parent=1 // pred_fallthru
      _
    // Predicated region
    $region10: #{tpu_custom_call.1} parent=1 // pred_check
      _
    $region11: #{tpu_custom_call.1} parent=1 // pred_check_branch
      %35 = sbr.rel (0) target = $region13
    $region12: #{tpu_custom_call.1} parent=1 // pred_region
      %36 = dma.done [#allocation3], 512
    $region13: #{tpu_custom_call.1} parent=1 // pred_fallthru
      _
    // Predicated region
    $region14: #{tpu_custom_call.1} parent=1 // pred_check
      _
    $region15: #{tpu_custom_call.1} parent=1 // pred_check_branch
      %38 = sbr.rel (0) target = $region17
    $region16: #{tpu_custom_call.1} parent=1 // pred_region
      %39 = dma.done [#allocation6], 2048
    $region17: #{tpu_custom_call.1} parent=1 // pred_fallthru
      _
    %v41 = vld [vmem:[#allocation2] sm:$0xff]
    %v42 = vld [vmem:[#allocation2 + $0x8] sm:$0xff]
    %v43 = vld [vmem:[#allocation2 + $0x10] sm:$0xff]
    %v44 = vld [vmem:[#allocation2 + $0x18] sm:$0xff]
    %v45 = vld [vmem:[#allocation5] sm:$0xf]
    %v46 = vld [vmem:[#allocation5 + $0x4] sm:$0xf]
    %v47 = vld [vmem:[#allocation5 + $0x8] sm:$0xf]
    %v48 = vld [vmem:[#allocation5 + $0xc] sm:$0xf]
    %v49 = vld [vmem:[#allocation5 + $0x10] sm:$0xf]
    %v50 = vld [vmem:[#allocation5 + $0x14] sm:$0xf]
    %v51 = vld [vmem:[#allocation5 + $0x18] sm:$0xf]
    %v52 = vld [vmem:[#allocation5 + $0x1c] sm:$0xf]
    %v53 = vld [vmem:[#allocation5 + $0x20] sm:$0xf]
    %v54 = vld [vmem:[#allocation5 + $0x24] sm:$0xf]
    %v55 = vld [vmem:[#allocation5 + $0x28] sm:$0xf]
    %v56 = vld [vmem:[#allocation5 + $0x2c] sm:$0xf]
    %v57 = vld [vmem:[#allocation5 + $0x30] sm:$0xf]
    %v58 = vld [vmem:[#allocation5 + $0x34] sm:$0xf]
    %v59 = vld [vmem:[#allocation5 + $0x38] sm:$0xf]
    %v60 = vld [vmem:[#allocation5 + $0x3c] sm:$0xf]
    %v61 = vld [vmem:[#allocation5 + $0x40] sm:$0xf]
    %v62 = vld [vmem:[#allocation5 + $0x44] sm:$0xf]
    %v63 = vld [vmem:[#allocation5 + $0x48] sm:$0xf]
    %v64 = vld [vmem:[#allocation5 + $0x4c] sm:$0xf]
    %v65 = vld [vmem:[#allocation5 + $0x50] sm:$0xf]
    %v66 = vld [vmem:[#allocation5 + $0x54] sm:$0xf]
    %v67 = vld [vmem:[#allocation5 + $0x58] sm:$0xf]
    %v68 = vld [vmem:[#allocation5 + $0x5c] sm:$0xf]
    %v69 = vld [vmem:[#allocation5 + $0x60] sm:$0xf]
    %v70 = vld [vmem:[#allocation5 + $0x64] sm:$0xf]
    %v71 = vld [vmem:[#allocation5 + $0x68] sm:$0xf]
    %v72 = vld [vmem:[#allocation5 + $0x6c] sm:$0xf]
    %v73 = vld [vmem:[#allocation5 + $0x70] sm:$0xf]
    %v74 = vld [vmem:[#allocation5 + $0x74] sm:$0xf]
    %v75 = vld [vmem:[#allocation5 + $0x78] sm:$0xf]
    %v76 = vld [vmem:[#allocation5 + $0x7c] sm:$0xf]
    %v81 = vunpack.c.l.b16 %v41
    %v82 = vunpack.c.h.b16 %v41
    %v83 = vunpack.c.l.b16 %v42
    %v84 = vunpack.c.h.b16 %v42
    %v85 = vunpack.c.l.b16 %v43
    %v86 = vunpack.c.h.b16 %v43
    %v87 = vunpack.c.l.b16 %v44
    %v88 = vunpack.c.h.b16 %v44
    %v89 = vpack.c.b16 %v83, %v81
    %v90 = vpack.c.b16 %v84, %v82
    %v91 = vpack.c.b16 %v87, %v85
    %v92 = vpack.c.b16 %v88, %v86
    %v129 = vunpack.c.l.b16 %v45
    %v130 = vunpack.c.l.b16 %v46
    %v131 = vunpack.c.l.b16 %v47
    %v132 = vunpack.c.l.b16 %v48
    %v133 = vunpack.c.l.b16 %v49
    %v134 = vunpack.c.l.b16 %v50
    %v135 = vunpack.c.l.b16 %v51
    %v136 = vunpack.c.l.b16 %v52
    %v137 = vunpack.c.l.b16 %v53
    %v138 = vunpack.c.l.b16 %v54
    %v139 = vunpack.c.l.b16 %v55
    %v140 = vunpack.c.l.b16 %v56
    %v141 = vunpack.c.l.b16 %v57
    %v142 = vunpack.c.l.b16 %v58
    %v143 = vunpack.c.l.b16 %v59
    %v144 = vunpack.c.l.b16 %v60
    %v145 = vunpack.c.l.b16 %v61
    %v146 = vunpack.c.l.b16 %v62
    %v147 = vunpack.c.l.b16 %v63
    %v148 = vunpack.c.l.b16 %v64
    %v149 = vunpack.c.l.b16 %v65
    %v150 = vunpack.c.l.b16 %v66
    %v151 = vunpack.c.l.b16 %v67
    %v152 = vunpack.c.l.b16 %v68
    %v153 = vunpack.c.l.b16 %v69
    %v154 = vunpack.c.l.b16 %v70
    %v155 = vunpack.c.l.b16 %v71
    %v156 = vunpack.c.l.b16 %v72
    %v157 = vunpack.c.l.b16 %v73
    %v158 = vunpack.c.l.b16 %v74
    %v159 = vunpack.c.l.b16 %v75
    %v160 = vunpack.c.l.b16 %v76
    %v161 = vpack.c.b16 %v130, %v129
    %v162 = vpack.c.b16 %v132, %v131
    %v163 = vpack.c.b16 %v134, %v133
    %v164 = vpack.c.b16 %v136, %v135
    %v165 = vpack.c.b16 %v138, %v137
    %v166 = vpack.c.b16 %v140, %v139
    %v167 = vpack.c.b16 %v142, %v141
    %v168 = vpack.c.b16 %v144, %v143
    %v169 = vpack.c.b16 %v146, %v145
    %v170 = vpack.c.b16 %v148, %v147
    %v171 = vpack.c.b16 %v150, %v149
    %v172 = vpack.c.b16 %v152, %v151
    %v173 = vpack.c.b16 %v154, %v153
    %v174 = vpack.c.b16 %v156, %v155
    %v175 = vpack.c.b16 %v158, %v157
    %v176 = vpack.c.b16 %v160, %v159
    %193 = vmatprep.subr.bf16.mxu0 0
    %194 = vmatpush1.bf16.msra.mxu0 %v161
    %195 = vmatprep.subr.bf16.mxu0 0
    %196 = vmatpush1.bf16.msra.mxu0 %v162
    %197 = vmatprep.subr.bf16.mxu0 0
    %198 = vmatpush1.bf16.msra.mxu0 %v163
    %199 = vmatprep.subr.bf16.mxu0 0
    %200 = vmatpush1.bf16.msra.mxu0 %v164
    %201 = vmatprep.subr.bf16.mxu0 0
    %202 = vmatpush1.bf16.msra.mxu0 %v165
    %203 = vmatprep.subr.bf16.mxu0 0
    %204 = vmatpush1.bf16.msra.mxu0 %v166
    %205 = vmatprep.subr.bf16.mxu0 0
    %206 = vmatpush1.bf16.msra.mxu0 %v167
    %207 = vmatprep.subr.bf16.mxu0 0
    %208 = vmatpush1.bf16.msra.mxu0 %v168
    %209 = vmatprep.subr.bf16.mxu0 0
    %210 = vmatpush1.bf16.msra.mxu0 %v169
    %211 = vmatprep.subr.bf16.mxu0 0
    %212 = vmatpush1.bf16.msra.mxu0 %v170
    %213 = vmatprep.subr.bf16.mxu0 0
    %214 = vmatpush1.bf16.msra.mxu0 %v171
    %215 = vmatprep.subr.bf16.mxu0 0
    %216 = vmatpush1.bf16.msra.mxu0 %v172
    %217 = vmatprep.subr.bf16.mxu0 0
    %218 = vmatpush1.bf16.msra.mxu0 %v173
    %219 = vmatprep.subr.bf16.mxu0 0
    %220 = vmatpush1.bf16.msra.mxu0 %v174
    %221 = vmatprep.subr.bf16.mxu0 0
    %222 = vmatpush1.bf16.msra.mxu0 %v175
    %223 = vmatprep.subr.bf16.mxu0 0
    %224 = vmatpush1.bf16.msra.mxu0 %v176
    %225 = vmatprep.mubr.bf16.mxu0 %v90
    %226 = vmatmul.mubr.bf16.gmra.mrb[0].mxu0 %v89
    %v227 = vpop.f32.mrb[0].mxu0
    %v228 = vadd.f32 0.0, %v227
    %v229 = vpop.f32.mrb[0].mxu0
    %v230 = vpop.f32.mrb[0].mxu0
    %v231 = vadd.f32 0.0, %v230
    %v232 = vpop.f32.mrb[0].mxu0
    %233 = vmatprep.mubr.bf16.mxu0 %v92
    %234 = vmatmul.mubr.bf16.gmra.mrb[0].mxu0 %v91
    %v235 = vpop.f32.mrb[0].mxu0
    %v236 = vadd.f32 0.0, %v235
    %v237 = vpop.f32.mrb[0].mxu0
    %v238 = vpop.f32.mrb[0].mxu0
    %v239 = vadd.f32 0.0, %v238
    %v240 = vpop.f32.mrb[0].mxu0
    %241 = vdwg.mxu0
    %242 = vst [vmem:[#allocation7] sm:$0xff] %v228
    %243 = vst [vmem:[#allocation7 + $0x8] sm:$0xff] %v231
    %244 = vst [vmem:[#allocation7 + $0x10] sm:$0xff] %v236
    %245 = vst [vmem:[#allocation7 + $0x18] sm:$0xff] %v239
    // Predicated region
    $region18: #{tpu_custom_call.1} parent=1 // pred_check
      _
    $region19: #{tpu_custom_call.1} parent=1 // pred_check_branch
      %247 = sbr.rel (0) target = $region21
    $region20: #{tpu_custom_call.1} parent=1 // pred_region
      %s249 = ssub.s32 512, 512
      %250 = vsyncadd [#allocation4], %s249
      %s251 = sshll.u32 [#allocation7], 4
      %s252 = int_to_ptr.vmem [resolvable:$true] %s251
      %257 = dma.vmem_to_hbm [thread:$0]  %s252, 512, %s2, [#allocation4], 128, 128, 8
    $region21: #{tpu_custom_call.1} parent=1 // pred_fallthru
      _
    // Predicated region
    $region22: #{tpu_custom_call.1} parent=1 // pred_check
      _
    $region23: #{tpu_custom_call.1} parent=1 // pred_check_branch
      %259 = sbr.rel (0) target = $region25
    $region24: #{tpu_custom_call.1} parent=1 // pred_region
      %260 = dma.done [#allocation4], 512
    $region25: #{tpu_custom_call.1} parent=1 // pred_fallthru
      _
    %261 = vsyncpa [#allocation3], 1
    %262 = vsyncpa [#allocation6], 1
    %263 = vsyncpa [#allocation4], 1

</llo_original>
